<compile_context>
chip_gen: v6e
topology: v6e:2x2x1
jax: 0.10.0
libtpu: 0.0.40
codegen_flags: <defaults>
</compile_context>

<pallas_src>
import jax
import jax.numpy as jnp
from jax.experimental import pallas as pl
from jax.experimental.pallas import tpu as pltpu


def _make_norm_kernel(scale, bias, out_dtype):
    """Kernel closure with baked-in affine constants (constant-folded)."""

    def kernel(x_ref, o_ref):
        # Upcast to f32 for the math (no-op for f32 inputs; avoids bf16 VPU
        # issues on v5e), write back in the native output dtype.
        xv = x_ref[...].astype(jnp.float32)
        o_ref[...] = (xv * scale + bias).astype(out_dtype)

    return kernel


def normalization_layer(x, input_min, input_max, *, target_block_bytes=2 * 1024 * 1024):
    """y = (x - input_min) / (input_max - input_min), elementwise (Pallas TPU)."""
    orig_shape = x.shape
    dtype = x.dtype

    # Fold the two constants into scale/bias at trace time.
    mn = float(input_min)
    mx = float(input_max)
    scale = 1.0 / (mx - mn)
    bias = -mn * scale

    n = int(x.size)
    flat = x.reshape(-1)  # contiguous reshape: no data movement

    # Pick the widest lane dimension that divides n exactly (lane-dense,
    # unmasked vector stores, no padding / slicing passes).
    lanes = None
    for cand in (1024, 512, 256, 128):
        if n % cand == 0:
            lanes = cand
            break

    n_eff = n
    if lanes is None:
        # Rare ragged fallback: one pad to a multiple of 128 lanes.
        lanes = 128
        pad = (-n) % lanes
        flat = jnp.pad(flat, (0, pad))
        n_eff = n + pad

    rows = n_eff // lanes
    itemsize = jnp.dtype(dtype).itemsize

    # ~2 MiB blocks; rows of the block must be a multiple of 8 unless the
    # block covers the full array.
    tile_rows = max(8, (target_block_bytes // (lanes * itemsize)) // 8 * 8)
    if rows <= tile_rows:
        block = (rows, lanes)  # single block == full array dims (any rows ok)
        grid = (1,)
    else:
        block = (tile_rows, lanes)
        grid = (pl.cdiv(rows, tile_rows),)  # Pallas masks the partial edge block

    x2d = flat.reshape(rows, lanes)
    kernel = _make_norm_kernel(scale, bias, dtype)

    out2d = pl.pallas_call(
        kernel,
        out_shape=jax.ShapeDtypeStruct((rows, lanes), dtype),
        grid_spec=pltpu.PrefetchScalarGridSpec(
            num_scalar_prefetch=0,
            grid=grid,
            in_specs=[pl.BlockSpec(block, lambda i: (i, 0))],
            out_specs=pl.BlockSpec(block, lambda i: (i, 0)),
        ),
        compiler_params=pltpu.CompilerParams(
            dimension_semantics=("parallel",),
        ),
    )(x2d)

    if n_eff != n:
        out = out2d.reshape(-1)[:n].reshape(orig_shape)
    else:
        out = out2d.reshape(orig_shape)
    return out


if __name__ == "__main__":
    key = jax.random.PRNGKey(0)
    # Small NCHW input consistent with a conv-style pipeline: [B, C, H, W]
    x = jax.random.uniform(
        key, (2, 4, 16, 16), dtype=jnp.float32, minval=-3.0, maxval=7.0
    )

    input_min, input_max = -3.0, 7.0

    y = normalization_layer(x, input_min, input_max)
    y = jax.block_until_ready(y)

    # Reference in plain JAX (mirrors the PyTorch forward).
    y_ref = (x - input_min) / (input_max - input_min)
    assert y.shape == x.shape and y.dtype == x.dtype
    assert jnp.allclose(y, y_ref, atol=1e-5, rtol=1e-5)

    print("KERNEL_OK")
</pallas_src>

<mosaic_0001>
module attributes {stable_mosaic.version = 11 : i64} {
  func.func @kernel(%arg0: i32, %arg1: memref<2x1024xf32, #tpu.memory_space<vmem>>, %arg2: memref<2x1024xf32, #tpu.memory_space<vmem>>) attributes {dimension_semantics = [#tpu.dimension_semantics<parallel>], iteration_bounds = array<i64: 1>, scalar_prefetch = 0 : i64, scratch_operands = 0 : i64, tpu.core_type = #tpu.core_type<tc>, window_params = [{transform_indices = @transform_0, window_bounds = array<i64: 2, 1024>}, {transform_indices = @transform_1, window_bounds = array<i64: 2, 1024>}]} {
    %c0 = arith.constant 0 : index
    %c0_0 = arith.constant 0 : index
    %0 = vector.load %arg1[%c0, %c0_0] : memref<2x1024xf32, #tpu.memory_space<vmem>>, vector<2x1024xf32>
    %cst = arith.constant 1.000000e-01 : f32
    %1 = vector.broadcast %cst : f32 to vector<2x1024xf32>
    %2 = arith.mulf %0, %1 : vector<2x1024xf32>
    %cst_1 = arith.constant 3.000000e-01 : f32
    %3 = vector.broadcast %cst_1 : f32 to vector<2x1024xf32>
    %4 = arith.addf %2, %3 : vector<2x1024xf32>
    %c0_2 = arith.constant 0 : index
    %c0_3 = arith.constant 0 : index
    %5 = vector.load %arg2[%c0_2, %c0_3] : memref<2x1024xf32, #tpu.memory_space<vmem>>, vector<2x1024xf32>
    tpu.vector_store %arg2[%c0_2, %c0_3], %4 {strides = array<i32>} : memref<2x1024xf32, #tpu.memory_space<vmem>>, vector<2x1024xf32>,
    return
  }
  func.func @transform_0(%arg0: i32) -> (i32, i32) {
    %c0_i32 = arith.constant 0 : i32
    %c0_i32_0 = arith.constant 0 : i32
    return %arg0, %c0_i32 : i32, i32
  }
  func.func @transform_1(%arg0: i32) -> (i32, i32) {
    %c0_i32 = arith.constant 0 : i32
    %c0_i32_0 = arith.constant 0 : i32
    return %arg0, %c0_i32 : i32, i32
  }
}

</mosaic_0001>

<llo_original>
// kernel: tpu_custom_call.1
$region0: #{tpu_custom_call.1}
  #allocation0 [shape = 'u32[]', space=smem, size = 0x4, offset = 0x4, fixed_abs, tag = 'smem constant byte address 0x4 - core index']
  #allocation1 [shape = 'u32[144,128]{1,0:T(1,128)}', space=vmem, size = 0x12000, scoped, tag = 'internal scratch']
  %s0 = inlined_call_operand.hbm [shape: f32[2,1024], index: 0, kind: input, shape index: {}]
  %s1 = inlined_call_operand.hbm [shape: f32[2,1024], index: 1, kind: output, shape index: {}]
  %s2 = sld [smem:[#allocation0]]
  $region18: #{tpu_custom_call.1} parent=0
    _
  %s4 = ssub.s32 1, %s2
  %s5 = scalar_select 0, %s4, %s2
  $region1: #{tpu_custom_call.1} parent=0
    #allocation2 [shape = 'u8[8192]{0}', space=vmem, size = 0x2000, scoped, tag = 'input window, operand 0, single buffered']
    #allocation3 [shape = 's32[1]{0}', space=sflag, size = 0x4, scoped, tag = 'scoped memory for tpu_custom_call.1']
    #allocation4 [shape = 's32[1]{0}', space=sflag, size = 0x4, scoped, tag = 'scoped memory for tpu_custom_call.1']
    #allocation5 [shape = 'u8[8192]{0}', space=vmem, size = 0x2000, scoped, tag = 'output window, operand 0, single buffered']
    %6 = vsyncpa [#allocation3], 0
    %7 = vsyncpa [#allocation4], 0
    // Predicated region
    $region2: #{tpu_custom_call.1} parent=1 // pred_check
      _
    $region3: #{tpu_custom_call.1} parent=1 // pred_check_branch
      %9 = sbr.rel (0) target = $region5
    $region4: #{tpu_custom_call.1} parent=1 // pred_region
      %s11 = ssub.s32 256, 256
      %12 = vsyncadd [#allocation3], %s11
      %s14 = sshll.u32 [#allocation2], 4
      %s15 = int_to_ptr.vmem [resolvable:$true] %s14
      %17 = dma.hbm_to_vmem [thread:$0]  %s0, 256, %s15, [#allocation3]
    $region5: #{tpu_custom_call.1} parent=1 // pred_fallthru
      _
    // Predicated region
    $region6: #{tpu_custom_call.1} parent=1 // pred_check
      _
    $region7: #{tpu_custom_call.1} parent=1 // pred_check_branch
      %19 = sbr.rel (0) target = $region9
    $region8: #{tpu_custom_call.1} parent=1 // pred_region
      %20 = dma.done [#allocation3], 256
    $region9: #{tpu_custom_call.1} parent=1 // pred_fallthru
      _
    %v21 = vld [vmem:[#allocation2] sm:$0xff]
    %v22 = vld [vmem:[#allocation2 + $0x8] sm:$0xff]
    %v23 = vmul.f32 %v21, 0.1
    %v24 = vmul.f32 %v22, 0.1
    %v25 = vadd.f32 %v23, 0.3
    %v26 = vadd.f32 %v24, 0.3
    %27 = vst [vmem:[#allocation5] sm:$0xff] %v25
    %28 = vst [vmem:[#allocation5 + $0x8] sm:$0xff] %v26
    // Predicated region
    $region10: #{tpu_custom_call.1} parent=1 // pred_check
      _
    $region11: #{tpu_custom_call.1} parent=1 // pred_check_branch
      %30 = sbr.rel (0) target = $region13
    $region12: #{tpu_custom_call.1} parent=1 // pred_region
      %s32 = ssub.s32 256, 256
      %33 = vsyncadd [#allocation4], %s32
      %s35 = sshll.u32 [#allocation5], 4
      %s36 = int_to_ptr.vmem [resolvable:$true] %s35
      %38 = dma.vmem_to_hbm [thread:$0]  %s36, 256, %s1, [#allocation4]
    $region13: #{tpu_custom_call.1} parent=1 // pred_fallthru
      _
    // Predicated region
    $region14: #{tpu_custom_call.1} parent=1 // pred_check
      _
    $region15: #{tpu_custom_call.1} parent=1 // pred_check_branch
      %40 = sbr.rel (0) target = $region17
    $region16: #{tpu_custom_call.1} parent=1 // pred_region
      %41 = dma.done [#allocation4], 256
    $region17: #{tpu_custom_call.1} parent=1 // pred_fallthru
      _
    %42 = vsyncpa [#allocation3], 1
    %43 = vsyncpa [#allocation4], 1

</llo_original>
